<compile_context>
chip_gen: v7x
topology: tpu7x:2x2x1
jax: 0.10.0
libtpu: 0.0.40
codegen_flags: <defaults>
</compile_context>

<pallas_src>
import functools

import jax
import jax.numpy as jnp
from jax import lax
from jax.experimental import pallas as pl
from jax.experimental.pallas import tpu as pltpu

BN_EPS = 1e-5
LANE = 128


def _round_up(x, m):
    return (x + m - 1) // m * m


def _vmem_budget_bytes():
    # Generation-aware scoped-VMEM budget: ~3/4 of physical VMEM when we can
    # query it, otherwise a conservative 48 MiB (safe even on v7x's 64 MiB).
    try:
        info = pltpu.get_tpu_info()
        cap = getattr(info, "vmem_capacity_bytes", None)
        if cap:
            return int(cap) * 3 // 4
    except Exception:
        pass
    return 48 * 1024 * 1024


# ---------- Pass 1: conv matmul + per-channel sum / sum-of-squares ------------

def _conv_stats_kernel(p_ref, w_ref, conv_ref, stats_ref):
    # p_ref: (TM, Kp) | w_ref: (Kp, TC) | conv_ref: (TM, TC) | stats_ref: (2, TC)
    # grid = (c_tile [parallel], m_tile [arbitrary/reduction-last])
    @pl.when(pl.program_id(1) == 0)
    def _():
        stats_ref[...] = jnp.zeros_like(stats_ref)

    conv = jnp.dot(p_ref[...], w_ref[...], preferred_element_type=jnp.float32)
    conv_ref[...] = conv.astype(conv_ref.dtype)            # bf16 (or f32) store

    # Stats from the f32 accumulator (pre-cast); two row-slice accumulations
    # into the resident (2, TC) output block (no sublane concat).
    stats_ref[0:1, :] += jnp.sum(conv, axis=0, keepdims=True)
    stats_ref[1:2, :] += jnp.sum(conv * conv, axis=0, keepdims=True)


# ---------- Pass 2: precomputed scale/shift -> fma + ReLU ---------------------

def _bn_relu_kernel(conv_ref, scale_ref, shift_ref, o_ref):
    x = conv_ref[...].astype(jnp.float32)                  # upcast; BN math in f32
    y = x * scale_ref[...] + shift_ref[...]
    o_ref[...] = jnp.maximum(y, 0.0).astype(o_ref.dtype)


# ---------- im2col (wrapper-side patch extraction) ----------------------------

def _im2col(x_nchw, kernel_size, stride, padding):
    # x_nchw (N, Cin, H, W) -> patches (N*OH*OW, KH*KW*Cin), cols (kh, kw, cin)
    n, cin, h, w = x_nchw.shape
    kh = kw = kernel_size
    x = jnp.transpose(x_nchw, (0, 2, 3, 1))  # NHWC
    x = jnp.pad(x, ((0, 0), (padding, padding), (padding, padding), (0, 0)))
    oh = (h + 2 * padding - kh) // stride + 1
    ow = (w + 2 * padding - kw) // stride + 1
    cols = []
    for i in range(kh):
        for j in range(kw):
            sl = x[:, i: i + (oh - 1) * stride + 1: stride,
                      j: j + (ow - 1) * stride + 1: stride, :]  # (N, OH, OW, Cin)
            cols.append(sl)
    patches = jnp.concatenate(cols, axis=-1)  # (N, OH, OW, KH*KW*Cin)
    return patches.reshape(n * oh * ow, kh * kw * cin), (n, oh, ow)


@functools.partial(
    jax.jit, static_argnames=("kernel_size", "stride", "padding", "use_bf16"))
def conv_bn_relu(x_nchw, weight, gamma, beta, *, kernel_size, stride=1,
                 padding=0, use_bf16=True):
    """x_nchw: (N, Cin, H, W); weight: PyTorch layout (Cout, Cin, KH, KW)."""
    cout = weight.shape[0]
    patches, (n, oh, ow) = _im2col(x_nchw, kernel_size, stride, padding)
    m, k = patches.shape

    # Lane-dense / MXU-friendly padding.
    kp = _round_up(k, LANE)
    cp = _round_up(cout, LANE)
    # Cout tile -> "parallel" grid axis (v7x megacore) + smaller per-step tiles.
    tc = 256 if cp % 256 == 0 else LANE
    nc = cp // tc

    in_dtype = jnp.bfloat16 if use_bf16 else jnp.float32
    conv_dtype = jnp.bfloat16 if use_bf16 else jnp.float32   # intermediate dtype
    in_bytes = jnp.dtype(in_dtype).itemsize
    conv_bytes = jnp.dtype(conv_dtype).itemsize

    vmem_budget = _vmem_budget_bytes()

    # Pass-1 row tile: large as the budget allows (operands double-buffered).
    tm1 = min(512, _round_up(m, 8))

    def _pass1_footprint(t):
        return (2 * t * kp * in_bytes          # patches tile (double-buffered)
                + 2 * kp * tc * in_bytes       # weight tile  (double-buffered)
                + 2 * t * tc * conv_bytes      # conv-out tile (double-buffered)
                + 2 * 2 * tc * 4)              # stats accumulator

    while tm1 > 8 and _pass1_footprint(tm1) > vmem_budget:
        tm1 //= 2
    tm1 = max(8, (tm1 // 8) * 8)

    # Pass-2 row tile: pure elementwise -> largest tile that fits VMEM, kept a
    # power-of-two multiple of tm1 so both passes share the same padded M.
    m_ceil = _round_up(m, tm1)
    tm2 = tm1
    while (tm2 * 2 <= min(2048, m_ceil)
           and 2 * (tm2 * 2) * cp * (conv_bytes + 4) <= vmem_budget):
        tm2 *= 2

    mp = _round_up(m, tm2)          # multiple of both tm1 and tm2
    nm1 = mp // tm1
    nm2 = mp // tm2

    # Padded operands (zero rows contribute nothing to the stats, which divide
    # by the true M).
    patches_p = jnp.zeros((mp, kp), dtype=in_dtype).at[:m, :k].set(
        patches.astype(in_dtype))
    w_mat = jnp.transpose(weight, (2, 3, 1, 0)).reshape(k, cout)  # (kh,kw,cin)xCout
    w_p = jnp.zeros((kp, cp), dtype=in_dtype).at[:k, :cout].set(
        w_mat.astype(in_dtype))

    # ----- Pass 1: tiled matmul + per-channel stats ----------------------------
    cost1 = pl.CostEstimate(
        flops=2 * mp * kp * cp,
        transcendentals=0,
        bytes_accessed=(nc * mp * kp + kp * cp) * in_bytes
                       + mp * cp * conv_bytes + 2 * cp * 4)

    conv_out, stats = pl.pallas_call(
        _conv_stats_kernel,
        out_shape=(jax.ShapeDtypeStruct((mp, cp), conv_dtype),
                   jax.ShapeDtypeStruct((2, cp), jnp.float32)),
        grid_spec=pltpu.PrefetchScalarGridSpec(
            num_scalar_prefetch=0,
            grid=(nc, nm1),                       # (Cout tiles, M tiles)
            in_specs=[
                pl.BlockSpec((tm1, kp), lambda c, i: (i, 0)),
                pl.BlockSpec((kp, tc), lambda c, i: (0, c)),
            ],
            out_specs=[
                pl.BlockSpec((tm1, tc), lambda c, i: (i, c)),
                pl.BlockSpec((2, tc), lambda c, i: (0, c)),   # resident per-c accum
            ]),
        compiler_params=pltpu.CompilerParams(
            dimension_semantics=("parallel", "arbitrary"),
            vmem_limit_bytes=vmem_budget),
        cost_estimate=cost1,
    )(patches_p, w_p)

    # ----- BN finalize (tiny (1, Cp) XLA op between the passes) ---------------
    inv_m = 1.0 / float(m)
    mean = stats[0:1, :] * inv_m
    var = jnp.maximum(stats[1:2, :] * inv_m - mean * mean, 0.0)   # clamp >= 0
    inv_std = lax.rsqrt(var + BN_EPS)
    gamma_p = jnp.zeros((1, cp), jnp.float32).at[0, :cout].set(
        gamma.astype(jnp.float32))
    beta_p = jnp.zeros((1, cp), jnp.float32).at[0, :cout].set(
        beta.astype(jnp.float32))
    scale = gamma_p * inv_std
    shift = beta_p - mean * scale

    # ----- Pass 2: fma + ReLU over independent (large) row tiles ---------------
    cost2 = pl.CostEstimate(
        flops=3 * mp * cp,
        transcendentals=0,
        bytes_accessed=mp * cp * (conv_bytes + 4) + 2 * cp * 4)

    out_flat = pl.pallas_call(
        _bn_relu_kernel,
        out_shape=jax.ShapeDtypeStruct((mp, cp), jnp.float32),
        grid_spec=pltpu.PrefetchScalarGridSpec(
            num_scalar_prefetch=0,
            grid=(nm2,),
            in_specs=[
                pl.BlockSpec((tm2, cp), lambda i: (i, 0)),
                pl.BlockSpec((1, cp), lambda i: (0, 0)),
                pl.BlockSpec((1, cp), lambda i: (0, 0)),
            ],
            out_specs=pl.BlockSpec((tm2, cp), lambda i: (i, 0))),
        compiler_params=pltpu.CompilerParams(
            dimension_semantics=("parallel",),
            vmem_limit_bytes=vmem_budget),
        cost_estimate=cost2,
    )(conv_out, scale, shift)

    # Match PyTorch's NCHW output (the transpose is an extra HBM pass; keep
    # NHWC in real pipelines if the consumer allows).
    out = out_flat[:m, :cout].reshape(n, oh, ow, cout)   # NHWC
    return jnp.transpose(out, (0, 3, 1, 2))              # NCHW


def _reference(x_nchw, weight, gamma, beta, stride, padding):
    conv = lax.conv_general_dilated(
        x_nchw, weight, window_strides=(stride, stride),
        padding=[(padding, padding), (padding, padding)],
        dimension_numbers=("NCHW", "OIHW", "NCHW"))
    mean = jnp.mean(conv, axis=(0, 2, 3), keepdims=True)
    var = jnp.mean((conv - mean) ** 2, axis=(0, 2, 3), keepdims=True)
    y = (conv - mean) * lax.rsqrt(var + BN_EPS)
    y = y * gamma.reshape(1, -1, 1, 1) + beta.reshape(1, -1, 1, 1)
    return jnp.maximum(y, 0.0)


if __name__ == "__main__":
    # Small shapes consistent with the module's forward.
    N, CIN, COUT, H, W = 2, 4, 8, 16, 16
    KSIZE, STRIDE, PADDING = 3, 1, 1

    key = jax.random.PRNGKey(0)
    kx, kw = jax.random.split(key)
    x = jax.random.normal(kx, (N, CIN, H, W), dtype=jnp.float32)
    weight = jax.random.normal(kw, (COUT, CIN, KSIZE, KSIZE), dtype=jnp.float32) * 0.1
    gamma = jnp.ones((COUT,), dtype=jnp.float32)   # nn.BatchNorm2d default init
    beta = jnp.zeros((COUT,), dtype=jnp.float32)

    ref = _reference(x, weight, gamma, beta, STRIDE, PADDING)

    # f32 path (f32 operands + f32 intermediate): tight tolerance.
    out_f32 = conv_bn_relu(x, weight, gamma, beta, kernel_size=KSIZE,
                           stride=STRIDE, padding=PADDING, use_bf16=False)
    out_f32 = jax.block_until_ready(out_f32)
    assert out_f32.shape == ref.shape
    assert jnp.allclose(out_f32, ref, atol=1e-4, rtol=1e-4), "f32 mismatch vs reference"

    # bf16 path (bf16 MXU operands + bf16 conv intermediate, f32 accumulation
    # and BN math): looser tolerance from bf16 rounding.
    out_bf16 = conv_bn_relu(x, weight, gamma, beta, kernel_size=KSIZE,
                            stride=STRIDE, padding=PADDING, use_bf16=True)
    out_bf16 = jax.block_until_ready(out_bf16)
    assert out_bf16.shape == ref.shape
    assert jnp.allclose(out_bf16, ref, atol=3e-2, rtol=3e-2), "bf16 mismatch vs reference"

    print("KERNEL_OK")
</pallas_src>

<mosaic_0001>
module attributes {stable_mosaic.version = 11 : i64} {
  func.func @_conv_stats_kernel(%arg0: i32, %arg1: i32, %arg2: memref<512x128xf32, #tpu.memory_space<vmem>>, %arg3: memref<128x128xf32, #tpu.memory_space<vmem>>, %arg4: memref<512x128xf32, #tpu.memory_space<vmem>>, %arg5: memref<2x128xf32, #tpu.memory_space<vmem>>) attributes {dimension_semantics = [#tpu.dimension_semantics<parallel>, #tpu.dimension_semantics<arbitrary>], iteration_bounds = array<i64: 1, 1>, scalar_prefetch = 0 : i64, scratch_operands = 0 : i64, tpu.core_type = #tpu.core_type<tc>, window_params = [{transform_indices = @transform_0, window_bounds = array<i64: 512, 128>}, {transform_indices = @transform_1, window_bounds = array<i64: 128, 128>}, {transform_indices = @transform_2, window_bounds = array<i64: 512, 128>}, {transform_indices = @transform_3, window_bounds = array<i64: 2, 128>}]} {
    %c0_i32 = arith.constant 0 : i32
    %0 = arith.cmpi eq, %arg1, %c0_i32 : i32
    %1 = arith.extui %0 : i1 to i32
    %c0_i32_0 = arith.constant 0 : i32
    %2 = arith.cmpi ne, %1, %c0_i32_0 : i32
    scf.if %2 {
      %cst_15 = arith.constant 0.000000e+00 : f32
      %18 = vector.broadcast %cst_15 : f32 to vector<2x128xf32>
      %c0_16 = arith.constant 0 : index
      %c0_17 = arith.constant 0 : index
      %19 = vector.load %arg5[%c0_16, %c0_17] : memref<2x128xf32, #tpu.memory_space<vmem>>, vector<2x128xf32>
      tpu.vector_store %arg5[%c0_16, %c0_17], %18 {strides = array<i32>} : memref<2x128xf32, #tpu.memory_space<vmem>>, vector<2x128xf32>,
    } else {
    }
    %c0 = arith.constant 0 : index
    %c0_1 = arith.constant 0 : index
    %3 = vector.load %arg2[%c0, %c0_1] : memref<512x128xf32, #tpu.memory_space<vmem>>, vector<512x128xf32>
    %c0_2 = arith.constant 0 : index
    %c0_3 = arith.constant 0 : index
    %4 = vector.load %arg3[%c0_2, %c0_3] : memref<128x128xf32, #tpu.memory_space<vmem>>, vector<128x128xf32>
    %cst = arith.constant dense<0.000000e+00> : vector<512x128xf32>
    %5 = tpu.matmul %3, %4, %cst {dimension_numbers = #tpu.dot_dimension_numbers<[1], [0], [0], [1], [0, 0, 1, 1], [], []>} : vector<512x128xf32>, vector<128x128xf32>, vector<512x128xf32> -> vector<512x128xf32>
    %c0_4 = arith.constant 0 : index
    %c0_5 = arith.constant 0 : index
    %6 = vector.load %arg4[%c0_4, %c0_5] : memref<512x128xf32, #tpu.memory_space<vmem>>, vector<512x128xf32>
    tpu.vector_store %arg4[%c0_4, %c0_5], %5 {strides = array<i32>} : memref<512x128xf32, #tpu.memory_space<vmem>>, vector<512x128xf32>,
    %c0_6 = arith.constant 0 : index
    %c0_7 = arith.constant 0 : index
    %7 = vector.load %arg5[%c0_6, %c0_7] : memref<2x128xf32, #tpu.memory_space<vmem>>, vector<1x128xf32>
    %cst_8 = arith.constant dense<0.000000e+00> : vector<128xf32>
    %8 = vector.multi_reduction <add>, %5, %cst_8 [0] : vector<512x128xf32> to vector<128xf32>
    %9 = vector.shape_cast %8 : vector<128xf32> to vector<1x128xf32>
    %10 = arith.addf %7, %9 : vector<1x128xf32>
    %c0_9 = arith.constant 0 : index
    %c0_10 = arith.constant 0 : index
    %11 = vector.load %arg5[%c0_9, %c0_10] : memref<2x128xf32, #tpu.memory_space<vmem>>, vector<1x128xf32>
    tpu.vector_store %arg5[%c0_9, %c0_10], %10 {strides = array<i32>} : memref<2x128xf32, #tpu.memory_space<vmem>>, vector<1x128xf32>,
    %c1 = arith.constant 1 : index
    %c0_11 = arith.constant 0 : index
    %12 = vector.load %arg5[%c1, %c0_11] : memref<2x128xf32, #tpu.memory_space<vmem>>, vector<1x128xf32>
    %13 = arith.mulf %5, %5 : vector<512x128xf32>
    %cst_12 = arith.constant dense<0.000000e+00> : vector<128xf32>
    %14 = vector.multi_reduction <add>, %13, %cst_12 [0] : vector<512x128xf32> to vector<128xf32>
    %15 = vector.shape_cast %14 : vector<128xf32> to vector<1x128xf32>
    %16 = arith.addf %12, %15 : vector<1x128xf32>
    %c1_13 = arith.constant 1 : index
    %c0_14 = arith.constant 0 : index
    %17 = vector.load %arg5[%c1_13, %c0_14] : memref<2x128xf32, #tpu.memory_space<vmem>>, vector<1x128xf32>
    tpu.vector_store %arg5[%c1_13, %c0_14], %16 {strides = array<i32>} : memref<2x128xf32, #tpu.memory_space<vmem>>, vector<1x128xf32>,
    return
  }
  func.func @transform_0(%arg0: i32, %arg1: i32) -> (i32, i32) {
    %c0_i32 = arith.constant 0 : i32
    %c0_i32_0 = arith.constant 0 : i32
    return %arg1, %c0_i32 : i32, i32
  }
  func.func @transform_1(%arg0: i32, %arg1: i32) -> (i32, i32) {
    %c0_i32 = arith.constant 0 : i32
    %c0_i32_0 = arith.constant 0 : i32
    return %c0_i32, %arg0 : i32, i32
  }
  func.func @transform_2(%arg0: i32, %arg1: i32) -> (i32, i32) {
    %c0_i32 = arith.constant 0 : i32
    return %arg1, %arg0 : i32, i32
  }
  func.func @transform_3(%arg0: i32, %arg1: i32) -> (i32, i32) {
    %c0_i32 = arith.constant 0 : i32
    %c0_i32_0 = arith.constant 0 : i32
    return %c0_i32, %arg0 : i32, i32
  }
}

module attributes {stable_mosaic.version = 11 : i64} {
  func.func @_bn_relu_kernel(%arg0: i32, %arg1: memref<512x128xf32, #tpu.memory_space<vmem>>, %arg2: memref<1x128xf32, #tpu.memory_space<vmem>>, %arg3: memref<1x128xf32, #tpu.memory_space<vmem>>, %arg4: memref<512x128xf32, #tpu.memory_space<vmem>>) attributes {dimension_semantics = [#tpu.dimension_semantics<parallel>], iteration_bounds = array<i64: 1>, scalar_prefetch = 0 : i64, scratch_operands = 0 : i64, tpu.core_type = #tpu.core_type<tc>, window_params = [{transform_indices = @transform_0, window_bounds = array<i64: 512, 128>}, {pipeline_mode = #tpu.pipeline_mode<synchronous>, transform_indices = @transform_1, window_bounds = array<i64: 1, 128>}, {pipeline_mode = #tpu.pipeline_mode<synchronous>, transform_indices = @transform_2, window_bounds = array<i64: 1, 128>}, {transform_indices = @transform_3, window_bounds = array<i64: 512, 128>}]} {
    %c0 = arith.constant 0 : index
    %c0_0 = arith.constant 0 : index
    %0 = vector.load %arg1[%c0, %c0_0] : memref<512x128xf32, #tpu.memory_space<vmem>>, vector<512x128xf32>
    %c0_1 = arith.constant 0 : index
    %c0_2 = arith.constant 0 : index
    %1 = vector.load %arg2[%c0_1, %c0_2] : memref<1x128xf32, #tpu.memory_space<vmem>>, vector<1x128xf32>
    %2 = vector.broadcast %1 : vector<1x128xf32> to vector<512x128xf32>
    %3 = arith.mulf %0, %2 : vector<512x128xf32>
    %c0_3 = arith.constant 0 : index
    %c0_4 = arith.constant 0 : index
    %4 = vector.load %arg3[%c0_3, %c0_4] : memref<1x128xf32, #tpu.memory_space<vmem>>, vector<1x128xf32>
    %5 = vector.broadcast %4 : vector<1x128xf32> to vector<512x128xf32>
    %6 = arith.addf %3, %5 : vector<512x128xf32>
    %cst = arith.constant 0.000000e+00 : f32
    %7 = vector.broadcast %cst : f32 to vector<512x128xf32>
    %8 = arith.maximumf %6, %7 : vector<512x128xf32>
    %c0_5 = arith.constant 0 : index
    %c0_6 = arith.constant 0 : index
    %9 = vector.load %arg4[%c0_5, %c0_6] : memref<512x128xf32, #tpu.memory_space<vmem>>, vector<512x128xf32>
    tpu.vector_store %arg4[%c0_5, %c0_6], %8 {strides = array<i32>} : memref<512x128xf32, #tpu.memory_space<vmem>>, vector<512x128xf32>,
    return
  }
  func.func @transform_0(%arg0: i32) -> (i32, i32) {
    %c0_i32 = arith.constant 0 : i32
    %c0_i32_0 = arith.constant 0 : i32
    return %arg0, %c0_i32 : i32, i32
  }
  func.func @transform_1(%arg0: i32) -> (i32, i32) {
    %c0_i32 = arith.constant 0 : i32
    %c0_i32_0 = arith.constant 0 : i32
    %c0_i32_1 = arith.constant 0 : i32
    return %c0_i32, %c0_i32_0 : i32, i32
  }
  func.func @transform_2(%arg0: i32) -> (i32, i32) {
    %c0_i32 = arith.constant 0 : i32
    %c0_i32_0 = arith.constant 0 : i32
    %c0_i32_1 = arith.constant 0 : i32
    return %c0_i32, %c0_i32_0 : i32, i32
  }
  func.func @transform_3(%arg0: i32) -> (i32, i32) {
    %c0_i32 = arith.constant 0 : i32
    %c0_i32_0 = arith.constant 0 : i32
    return %arg0, %c0_i32 : i32, i32
  }
}

</mosaic_0001>

<llo_original>
// kernel: conv_bn_relu.3
$region0: #{conv_bn_relu.3}
  #allocation0 [shape = 'u32[]', space=smem, size = 0x4, offset = 0x4, fixed_abs, tag = 'smem constant byte address 0x4 - core index']
  #allocation1 [shape = 'u32[144,128]{1,0:T(1,128)}', space=vmem, size = 0x12000, scoped, tag = 'internal scratch']
  %s0 = inlined_call_operand.vmem [shape: f32[512,128], index: 0, kind: input, shape index: {}]
  %s1 = inlined_call_operand.vmem [shape: f32[1,128], index: 1, kind: input, shape index: {}]
  %s2 = inlined_call_operand.vmem [shape: f32[1,128], index: 2, kind: input, shape index: {}]
  %s3 = inlined_call_operand.vmem [shape: f32[512,128], index: 3, kind: output, shape index: {}]
  %s4 = sld [smem:[#allocation0]]
  $region22: #{conv_bn_relu.3} parent=0
    _
  %s6 = ssub.s32 1, %s4
  %s7 = scalar_select 0, %s6, %s4
  // Predicated region
  $region2: #{conv_bn_relu.3} parent=0 // pred_check
    _
  $region3: #{conv_bn_relu.3} parent=0 // pred_check_branch
    %9 = sbr.rel (0) target = $region5
  $region4: #{conv_bn_relu.3} parent=0 // pred_region
    _
  $region5: #{conv_bn_relu.3} parent=0 // pred_fallthru
    _
  // Predicated region
  $region6: #{conv_bn_relu.3} parent=0 // pred_check
    _
  $region7: #{conv_bn_relu.3} parent=0 // pred_check_branch
    %11 = sbr.rel (0) target = $region9
  $region8: #{conv_bn_relu.3} parent=0 // pred_region
    _
  $region9: #{conv_bn_relu.3} parent=0 // pred_fallthru
    _
  // Predicated region
  $region10: #{conv_bn_relu.3} parent=0 // pred_check
    _
  $region11: #{conv_bn_relu.3} parent=0 // pred_check_branch
    %13 = sbr.rel (0) target = $region13
  $region12: #{conv_bn_relu.3} parent=0 // pred_region
    _
  $region13: #{conv_bn_relu.3} parent=0 // pred_fallthru
    _
  %v14 = vld [vmem:[%s0] sm:$0xff]
  %v15 = vld [vmem:[%s0 + $0x8] sm:$0xff]
  %v16 = vld [vmem:[%s0 + $0x10] sm:$0xff]
  %v17 = vld [vmem:[%s0 + $0x18] sm:$0xff]
  %v18 = vld [vmem:[%s0 + $0x20] sm:$0xff]
  %v19 = vld [vmem:[%s0 + $0x28] sm:$0xff]
  %v20 = vld [vmem:[%s0 + $0x30] sm:$0xff]
  %v21 = vld [vmem:[%s0 + $0x38] sm:$0xff]
  %v22 = vld [vmem:[%s0 + $0x40] sm:$0xff]
  %v23 = vld [vmem:[%s0 + $0x48] sm:$0xff]
  %v24 = vld [vmem:[%s0 + $0x50] sm:$0xff]
  %v25 = vld [vmem:[%s0 + $0x58] sm:$0xff]
  %v26 = vld [vmem:[%s0 + $0x60] sm:$0xff]
  %v27 = vld [vmem:[%s0 + $0x68] sm:$0xff]
  %v28 = vld [vmem:[%s0 + $0x70] sm:$0xff]
  %v29 = vld [vmem:[%s0 + $0x78] sm:$0xff]
  %v30 = vld [vmem:[%s0 + $0x80] sm:$0xff]
  %v31 = vld [vmem:[%s0 + $0x88] sm:$0xff]
  %v32 = vld [vmem:[%s0 + $0x90] sm:$0xff]
  %v33 = vld [vmem:[%s0 + $0x98] sm:$0xff]
  %v34 = vld [vmem:[%s0 + $0xa0] sm:$0xff]
  %v35 = vld [vmem:[%s0 + $0xa8] sm:$0xff]
  %v36 = vld [vmem:[%s0 + $0xb0] sm:$0xff]
  %v37 = vld [vmem:[%s0 + $0xb8] sm:$0xff]
  %v38 = vld [vmem:[%s0 + $0xc0] sm:$0xff]
  %v39 = vld [vmem:[%s0 + $0xc8] sm:$0xff]
  %v40 = vld [vmem:[%s0 + $0xd0] sm:$0xff]
  %v41 = vld [vmem:[%s0 + $0xd8] sm:$0xff]
  %v42 = vld [vmem:[%s0 + $0xe0] sm:$0xff]
  %v43 = vld [vmem:[%s0 + $0xe8] sm:$0xff]
  %v44 = vld [vmem:[%s0 + $0xf0] sm:$0xff]
  %v45 = vld [vmem:[%s0 + $0xf8] sm:$0xff]
  %v46 = vld [vmem:[%s0 + $0x100] sm:$0xff]
  %v47 = vld [vmem:[%s0 + $0x108] sm:$0xff]
  %v48 = vld [vmem:[%s0 + $0x110] sm:$0xff]
  %v49 = vld [vmem:[%s0 + $0x118] sm:$0xff]
  %v50 = vld [vmem:[%s0 + $0x120] sm:$0xff]
  %v51 = vld [vmem:[%s0 + $0x128] sm:$0xff]
  %v52 = vld [vmem:[%s0 + $0x130] sm:$0xff]
  %v53 = vld [vmem:[%s0 + $0x138] sm:$0xff]
  %v54 = vld [vmem:[%s0 + $0x140] sm:$0xff]
  %v55 = vld [vmem:[%s0 + $0x148] sm:$0xff]
  %v56 = vld [vmem:[%s0 + $0x150] sm:$0xff]
  %v57 = vld [vmem:[%s0 + $0x158] sm:$0xff]
  %v58 = vld [vmem:[%s0 + $0x160] sm:$0xff]
  %v59 = vld [vmem:[%s0 + $0x168] sm:$0xff]
  %v60 = vld [vmem:[%s0 + $0x170] sm:$0xff]
  %v61 = vld [vmem:[%s0 + $0x178] sm:$0xff]
  %v62 = vld [vmem:[%s0 + $0x180] sm:$0xff]
  %v63 = vld [vmem:[%s0 + $0x188] sm:$0xff]
  %v64 = vld [vmem:[%s0 + $0x190] sm:$0xff]
  %v65 = vld [vmem:[%s0 + $0x198] sm:$0xff]
  %v66 = vld [vmem:[%s0 + $0x1a0] sm:$0xff]
  %v67 = vld [vmem:[%s0 + $0x1a8] sm:$0xff]
  %v68 = vld [vmem:[%s0 + $0x1b0] sm:$0xff]
  %v69 = vld [vmem:[%s0 + $0x1b8] sm:$0xff]
  %v70 = vld [vmem:[%s0 + $0x1c0] sm:$0xff]
  %v71 = vld [vmem:[%s0 + $0x1c8] sm:$0xff]
  %v72 = vld [vmem:[%s0 + $0x1d0] sm:$0xff]
  %v73 = vld [vmem:[%s0 + $0x1d8] sm:$0xff]
  %v74 = vld [vmem:[%s0 + $0x1e0] sm:$0xff]
  %v75 = vld [vmem:[%s0 + $0x1e8] sm:$0xff]
  %v76 = vld [vmem:[%s0 + $0x1f0] sm:$0xff]
  %v77 = vld [vmem:[%s0 + $0x1f8] sm:$0xff]
  %v78 = vld [vmem:[%s1] sm:$0x1]
  %v80 = vlaneseq
  %v81 = vshrl.u32 %v80, 7
  %v82 = vsub.s32 0, %v81
  %v83 = vrot.slane %v78, %v82
  %v85 = vmul.f32 %v14, %v83
  %v86 = vmul.f32 %v15, %v83
  %v87 = vmul.f32 %v16, %v83
  %v88 = vmul.f32 %v17, %v83
  %v89 = vmul.f32 %v18, %v83
  %v90 = vmul.f32 %v19, %v83
  %v91 = vmul.f32 %v20, %v83
  %v92 = vmul.f32 %v21, %v83
  %v93 = vmul.f32 %v22, %v83
  %v94 = vmul.f32 %v23, %v83
  %v95 = vmul.f32 %v24, %v83
  %v96 = vmul.f32 %v25, %v83
  %v97 = vmul.f32 %v26, %v83
  %v98 = vmul.f32 %v27, %v83
  %v99 = vmul.f32 %v28, %v83
  %v100 = vmul.f32 %v29, %v83
  %v101 = vmul.f32 %v30, %v83
  %v102 = vmul.f32 %v31, %v83
  %v103 = vmul.f32 %v32, %v83
  %v104 = vmul.f32 %v33, %v83
  %v105 = vmul.f32 %v34, %v83
  %v106 = vmul.f32 %v35, %v83
  %v107 = vmul.f32 %v36, %v83
  %v108 = vmul.f32 %v37, %v83
  %v109 = vmul.f32 %v38, %v83
  %v110 = vmul.f32 %v39, %v83
  %v111 = vmul.f32 %v40, %v83
  %v112 = vmul.f32 %v41, %v83
  %v113 = vmul.f32 %v42, %v83
  %v114 = vmul.f32 %v43, %v83
  %v115 = vmul.f32 %v44, %v83
  %v116 = vmul.f32 %v45, %v83
  %v117 = vmul.f32 %v46, %v83
  %v118 = vmul.f32 %v47, %v83
  %v119 = vmul.f32 %v48, %v83
  %v120 = vmul.f32 %v49, %v83
  %v121 = vmul.f32 %v50, %v83
  %v122 = vmul.f32 %v51, %v83
  %v123 = vmul.f32 %v52, %v83
  %v124 = vmul.f32 %v53, %v83
  %v125 = vmul.f32 %v54, %v83
  %v126 = vmul.f32 %v55, %v83
  %v127 = vmul.f32 %v56, %v83
  %v128 = vmul.f32 %v57, %v83
  %v129 = vmul.f32 %v58, %v83
  %v130 = vmul.f32 %v59, %v83
  %v131 = vmul.f32 %v60, %v83
  %v132 = vmul.f32 %v61, %v83
  %v133 = vmul.f32 %v62, %v83
  %v134 = vmul.f32 %v63, %v83
  %v135 = vmul.f32 %v64, %v83
  %v136 = vmul.f32 %v65, %v83
  %v137 = vmul.f32 %v66, %v83
  %v138 = vmul.f32 %v67, %v83
  %v139 = vmul.f32 %v68, %v83
  %v140 = vmul.f32 %v69, %v83
  %v141 = vmul.f32 %v70, %v83
  %v142 = vmul.f32 %v71, %v83
  %v143 = vmul.f32 %v72, %v83
  %v144 = vmul.f32 %v73, %v83
  %v145 = vmul.f32 %v74, %v83
  %v146 = vmul.f32 %v75, %v83
  %v147 = vmul.f32 %v76, %v83
  %v148 = vmul.f32 %v77, %v83
  %v149 = vld [vmem:[%s2] sm:$0x1]
  %v151 = vlaneseq
  %v152 = vshrl.u32 %v151, 7
  %v153 = vsub.s32 0, %v152
  %v154 = vrot.slane %v149, %v153
  %v156 = vadd.f32 %v85, %v154
  %v157 = vadd.f32 %v86, %v154
  %v158 = vadd.f32 %v87, %v154
  %v159 = vadd.f32 %v88, %v154
  %v160 = vadd.f32 %v89, %v154
  %v161 = vadd.f32 %v90, %v154
  %v162 = vadd.f32 %v91, %v154
  %v163 = vadd.f32 %v92, %v154
  %v164 = vadd.f32 %v93, %v154
  %v165 = vadd.f32 %v94, %v154
  %v166 = vadd.f32 %v95, %v154
  %v167 = vadd.f32 %v96, %v154
  %v168 = vadd.f32 %v97, %v154
  %v169 = vadd.f32 %v98, %v154
  %v170 = vadd.f32 %v99, %v154
  %v171 = vadd.f32 %v100, %v154
  %v172 = vadd.f32 %v101, %v154
  %v173 = vadd.f32 %v102, %v154
  %v174 = vadd.f32 %v103, %v154
  %v175 = vadd.f32 %v104, %v154
  %v176 = vadd.f32 %v105, %v154
  %v177 = vadd.f32 %v106, %v154
  %v178 = vadd.f32 %v107, %v154
  %v179 = vadd.f32 %v108, %v154
  %v180 = vadd.f32 %v109, %v154
  %v181 = vadd.f32 %v110, %v154
  %v182 = vadd.f32 %v111, %v154
  %v183 = vadd.f32 %v112, %v154
  %v184 = vadd.f32 %v113, %v154
  %v185 = vadd.f32 %v114, %v154
  %v186 = vadd.f32 %v115, %v154
  %v187 = vadd.f32 %v116, %v154
  %v188 = vadd.f32 %v117, %v154
  %v189 = vadd.f32 %v118, %v154
  %v190 = vadd.f32 %v119, %v154
  %v191 = vadd.f32 %v120, %v154
  %v192 = vadd.f32 %v121, %v154
  %v193 = vadd.f32 %v122, %v154
  %v194 = vadd.f32 %v123, %v154
  %v195 = vadd.f32 %v124, %v154
  %v196 = vadd.f32 %v125, %v154
  %v197 = vadd.f32 %v126, %v154
  %v198 = vadd.f32 %v127, %v154
  %v199 = vadd.f32 %v128, %v154
  %v200 = vadd.f32 %v129, %v154
  %v201 = vadd.f32 %v130, %v154
  %v202 = vadd.f32 %v131, %v154
  %v203 = vadd.f32 %v132, %v154
  %v204 = vadd.f32 %v133, %v154
  %v205 = vadd.f32 %v134, %v154
  %v206 = vadd.f32 %v135, %v154
  %v207 = vadd.f32 %v136, %v154
  %v208 = vadd.f32 %v137, %v154
  %v209 = vadd.f32 %v138, %v154
  %v210 = vadd.f32 %v139, %v154
  %v211 = vadd.f32 %v140, %v154
  %v212 = vadd.f32 %v141, %v154
  %v213 = vadd.f32 %v142, %v154
  %v214 = vadd.f32 %v143, %v154
  %v215 = vadd.f32 %v144, %v154
  %v216 = vadd.f32 %v145, %v154
  %v217 = vadd.f32 %v146, %v154
  %v218 = vadd.f32 %v147, %v154
  %v219 = vadd.f32 %v148, %v154
  %v220 = vmax.f32 %v156, 0.0
  %v221 = vmax.f32 %v157, 0.0
  %v222 = vmax.f32 %v158, 0.0
  %v223 = vmax.f32 %v159, 0.0
  %v224 = vmax.f32 %v160, 0.0
  %v225 = vmax.f32 %v161, 0.0
  %v226 = vmax.f32 %v162, 0.0
  %v227 = vmax.f32 %v163, 0.0
  %v228 = vmax.f32 %v164, 0.0
  %v229 = vmax.f32 %v165, 0.0
  %v230 = vmax.f32 %v166, 0.0
  %v231 = vmax.f32 %v167, 0.0
  %v232 = vmax.f32 %v168, 0.0
  %v233 = vmax.f32 %v169, 0.0
  %v234 = vmax.f32 %v170, 0.0
  %v235 = vmax.f32 %v171, 0.0
  %v236 = vmax.f32 %v172, 0.0
  %v237 = vmax.f32 %v173, 0.0
  %v238 = vmax.f32 %v174, 0.0
  %v239 = vmax.f32 %v175, 0.0
  %v240 = vmax.f32 %v176, 0.0
  %v241 = vmax.f32 %v177, 0.0
  %v242 = vmax.f32 %v178, 0.0
  %v243 = vmax.f32 %v179, 0.0
  %v244 = vmax.f32 %v180, 0.0
  %v245 = vmax.f32 %v181, 0.0
  %v246 = vmax.f32 %v182, 0.0
  %v247 = vmax.f32 %v183, 0.0
  %v248 = vmax.f32 %v184, 0.0
  %v249 = vmax.f32 %v185, 0.0
  %v250 = vmax.f32 %v186, 0.0
  %v251 = vmax.f32 %v187, 0.0
  %v252 = vmax.f32 %v188, 0.0
  %v253 = vmax.f32 %v189, 0.0
  %v254 = vmax.f32 %v190, 0.0
  %v255 = vmax.f32 %v191, 0.0
  %v256 = vmax.f32 %v192, 0.0
  %v257 = vmax.f32 %v193, 0.0
  %v258 = vmax.f32 %v194, 0.0
  %v259 = vmax.f32 %v195, 0.0
  %v260 = vmax.f32 %v196, 0.0
  %v261 = vmax.f32 %v197, 0.0
  %v262 = vmax.f32 %v198, 0.0
  %v263 = vmax.f32 %v199, 0.0
  %v264 = vmax.f32 %v200, 0.0
  %v265 = vmax.f32 %v201, 0.0
  %v266 = vmax.f32 %v202, 0.0
  %v267 = vmax.f32 %v203, 0.0
  %v268 = vmax.f32 %v204, 0.0
  %v269 = vmax.f32 %v205, 0.0
  %v270 = vmax.f32 %v206, 0.0
  %v271 = vmax.f32 %v207, 0.0
  %v272 = vmax.f32 %v208, 0.0
  %v273 = vmax.f32 %v209, 0.0
  %v274 = vmax.f32 %v210, 0.0
  %v275 = vmax.f32 %v211, 0.0
  %v276 = vmax.f32 %v212, 0.0
  %v277 = vmax.f32 %v213, 0.0
  %v278 = vmax.f32 %v214, 0.0
  %v279 = vmax.f32 %v215, 0.0
  %v280 = vmax.f32 %v216, 0.0
  %v281 = vmax.f32 %v217, 0.0
  %v282 = vmax.f32 %v218, 0.0
  %v283 = vmax.f32 %v219, 0.0
  %284 = vst [vmem:[%s3] sm:$0xff] %v220
  %285 = vst [vmem:[%s3 + $0x8] sm:$0xff] %v221
  %286 = vst [vmem:[%s3 + $0x10] sm:$0xff] %v222
  %287 = vst [vmem:[%s3 + $0x18] sm:$0xff] %v223
  %288 = vst [vmem:[%s3 + $0x20] sm:$0xff] %v224
  %289 = vst [vmem:[%s3 + $0x28] sm:$0xff] %v225
  %290 = vst [vmem:[%s3 + $0x30] sm:$0xff] %v226
  %291 = vst [vmem:[%s3 + $0x38] sm:$0xff] %v227
  %292 = vst [vmem:[%s3 + $0x40] sm:$0xff] %v228
  %293 = vst [vmem:[%s3 + $0x48] sm:$0xff] %v229
  %294 = vst [vmem:[%s3 + $0x50] sm:$0xff] %v230
  %295 = vst [vmem:[%s3 + $0x58] sm:$0xff] %v231
  %296 = vst [vmem:[%s3 + $0x60] sm:$0xff] %v232
  %297 = vst [vmem:[%s3 + $0x68] sm:$0xff] %v233
  %298 = vst [vmem:[%s3 + $0x70] sm:$0xff] %v234
  %299 = vst [vmem:[%s3 + $0x78] sm:$0xff] %v235
  %300 = vst [vmem:[%s3 + $0x80] sm:$0xff] %v236
  %301 = vst [vmem:[%s3 + $0x88] sm:$0xff] %v237
  %302 = vst [vmem:[%s3 + $0x90] sm:$0xff] %v238
  %303 = vst [vmem:[%s3 + $0x98] sm:$0xff] %v239
  %304 = vst [vmem:[%s3 + $0xa0] sm:$0xff] %v240
  %305 = vst [vmem:[%s3 + $0xa8] sm:$0xff] %v241
  %306 = vst [vmem:[%s3 + $0xb0] sm:$0xff] %v242
  %307 = vst [vmem:[%s3 + $0xb8] sm:$0xff] %v243
  %308 = vst [vmem:[%s3 + $0xc0] sm:$0xff] %v244
  %309 = vst [vmem:[%s3 + $0xc8] sm:$0xff] %v245
  %310 = vst [vmem:[%s3 + $0xd0] sm:$0xff] %v246
  %311 = vst [vmem:[%s3 + $0xd8] sm:$0xff] %v247
  %312 = vst [vmem:[%s3 + $0xe0] sm:$0xff] %v248
  %313 = vst [vmem:[%s3 + $0xe8] sm:$0xff] %v249
  %314 = vst [vmem:[%s3 + $0xf0] sm:$0xff] %v250
  %315 = vst [vmem:[%s3 + $0xf8] sm:$0xff] %v251
  %316 = vst [vmem:[%s3 + $0x100] sm:$0xff] %v252
  %317 = vst [vmem:[%s3 + $0x108] sm:$0xff] %v253
  %318 = vst [vmem:[%s3 + $0x110] sm:$0xff] %v254
  %319 = vst [vmem:[%s3 + $0x118] sm:$0xff] %v255
  %320 = vst [vmem:[%s3 + $0x120] sm:$0xff] %v256
  %321 = vst [vmem:[%s3 + $0x128] sm:$0xff] %v257
  %322 = vst [vmem:[%s3 + $0x130] sm:$0xff] %v258
  %323 = vst [vmem:[%s3 + $0x138] sm:$0xff] %v259
  %324 = vst [vmem:[%s3 + $0x140] sm:$0xff] %v260
  %325 = vst [vmem:[%s3 + $0x148] sm:$0xff] %v261
  %326 = vst [vmem:[%s3 + $0x150] sm:$0xff] %v262
  %327 = vst [vmem:[%s3 + $0x158] sm:$0xff] %v263
  %328 = vst [vmem:[%s3 + $0x160] sm:$0xff] %v264
  %329 = vst [vmem:[%s3 + $0x168] sm:$0xff] %v265
  %330 = vst [vmem:[%s3 + $0x170] sm:$0xff] %v266
  %331 = vst [vmem:[%s3 + $0x178] sm:$0xff] %v267
  %332 = vst [vmem:[%s3 + $0x180] sm:$0xff] %v268
  %333 = vst [vmem:[%s3 + $0x188] sm:$0xff] %v269
  %334 = vst [vmem:[%s3 + $0x190] sm:$0xff] %v270
  %335 = vst [vmem:[%s3 + $0x198] sm:$0xff] %v271
  %336 = vst [vmem:[%s3 + $0x1a0] sm:$0xff] %v272
  %337 = vst [vmem:[%s3 + $0x1a8] sm:$0xff] %v273
  %338 = vst [vmem:[%s3 + $0x1b0] sm:$0xff] %v274
  %339 = vst [vmem:[%s3 + $0x1b8] sm:$0xff] %v275
  %340 = vst [vmem:[%s3 + $0x1c0] sm:$0xff] %v276
  %341 = vst [vmem:[%s3 + $0x1c8] sm:$0xff] %v277
  %342 = vst [vmem:[%s3 + $0x1d0] sm:$0xff] %v278
  %343 = vst [vmem:[%s3 + $0x1d8] sm:$0xff] %v279
  %344 = vst [vmem:[%s3 + $0x1e0] sm:$0xff] %v280
  %345 = vst [vmem:[%s3 + $0x1e8] sm:$0xff] %v281
  %346 = vst [vmem:[%s3 + $0x1f0] sm:$0xff] %v282
  %347 = vst [vmem:[%s3 + $0x1f8] sm:$0xff] %v283
  // Predicated region
  $region14: #{conv_bn_relu.3} parent=0 // pred_check
    _
  $region15: #{conv_bn_relu.3} parent=0 // pred_check_branch
    %349 = sbr.rel (0) target = $region17
  $region16: #{conv_bn_relu.3} parent=0 // pred_region
    _
  $region17: #{conv_bn_relu.3} parent=0 // pred_fallthru
    _
  // Predicated region
  $region18: #{conv_bn_relu.3} parent=0 // pred_check
    _
  $region19: #{conv_bn_relu.3} parent=0 // pred_check_branch
    %351 = sbr.rel (0) target = $region21
  $region20: #{conv_bn_relu.3} parent=0 // pred_region
    _
  $region21: #{conv_bn_relu.3} parent=0 // pred_fallthru
    _

// kernel: conv_bn_relu.2
$region0: #{conv_bn_relu.2}
  #allocation0 [shape = 'u32[]', space=smem, size = 0x4, offset = 0x4, fixed_abs, tag = 'smem constant byte address 0x4 - core index']
  #allocation1 [shape = 'u32[144,128]{1,0:T(1,128)}', space=vmem, size = 0x12000, scoped, tag = 'internal scratch']
  %s0 = inlined_call_operand.vmem [shape: f32[512,128], index: 0, kind: input, shape index: {}]
  %s1 = inlined_call_operand.vmem [shape: f32[128,128], index: 1, kind: input, shape index: {}]
  %s2 = inlined_call_operand.vmem [shape: f32[512,128], index: 2, kind: output, shape index: {0}]
  %s3 = inlined_call_operand.vmem [shape: f32[2,128], index: 3, kind: output, shape index: {1}]
  %4 = xla_tuple %s2, %s3
  %s5 = sld [smem:[#allocation0]]
  $region30: #{conv_bn_relu.2} parent=0
    _
  %s7 = ssub.s32 1, %s5
  %s8 = scalar_select 0, %s7, %s5
  // Predicated region
  $region2: #{conv_bn_relu.2} parent=0 // pred_check
    _
  $region3: #{conv_bn_relu.2} parent=0 // pred_check_branch
    %10 = sbr.rel (0) target = $region5
  $region4: #{conv_bn_relu.2} parent=0 // pred_region
    _
  $region5: #{conv_bn_relu.2} parent=0 // pred_fallthru
    _
  // Predicated region
  $region6: #{conv_bn_relu.2} parent=0 // pred_check
    _
  $region7: #{conv_bn_relu.2} parent=0 // pred_check_branch
    %12 = sbr.rel (0) target = $region9
  $region8: #{conv_bn_relu.2} parent=0 // pred_region
    _
  $region9: #{conv_bn_relu.2} parent=0 // pred_fallthru
    _
  %p13 = scmp.eq.s32.totalorder 0, 0
  // Predicated region
  $region10: #{conv_bn_relu.2} parent=0 // pred_check
    %p14 = pneg %p13
  $region11: #{conv_bn_relu.2} parent=0 // pred_check_branch
    %16 = sbr.rel (%p14) target = $region13
  $region12: #{conv_bn_relu.2} parent=0 // pred_region
    %17 = vst [vmem:[%s3] sm:$0x3] 0.0
  $region13: #{conv_bn_relu.2} parent=0 // pred_fallthru
    _
  %v18 = vld [vmem:[%s0] sm:$0xff]
  %v19 = vld [vmem:[%s0 + $0x8] sm:$0xff]
  %v20 = vld [vmem:[%s0 + $0x10] sm:$0xff]
  %v21 = vld [vmem:[%s0 + $0x18] sm:$0xff]
  %v22 = vld [vmem:[%s0 + $0x20] sm:$0xff]
  %v23 = vld [vmem:[%s0 + $0x28] sm:$0xff]
  %v24 = vld [vmem:[%s0 + $0x30] sm:$0xff]
  %v25 = vld [vmem:[%s0 + $0x38] sm:$0xff]
  %v26 = vld [vmem:[%s0 + $0x40] sm:$0xff]
  %v27 = vld [vmem:[%s0 + $0x48] sm:$0xff]
  %v28 = vld [vmem:[%s0 + $0x50] sm:$0xff]
  %v29 = vld [vmem:[%s0 + $0x58] sm:$0xff]
  %v30 = vld [vmem:[%s0 + $0x60] sm:$0xff]
  %v31 = vld [vmem:[%s0 + $0x68] sm:$0xff]
  %v32 = vld [vmem:[%s0 + $0x70] sm:$0xff]
  %v33 = vld [vmem:[%s0 + $0x78] sm:$0xff]
  %v34 = vld [vmem:[%s0 + $0x80] sm:$0xff]
  %v35 = vld [vmem:[%s0 + $0x88] sm:$0xff]
  %v36 = vld [vmem:[%s0 + $0x90] sm:$0xff]
  %v37 = vld [vmem:[%s0 + $0x98] sm:$0xff]
  %v38 = vld [vmem:[%s0 + $0xa0] sm:$0xff]
  %v39 = vld [vmem:[%s0 + $0xa8] sm:$0xff]
  %v40 = vld [vmem:[%s0 + $0xb0] sm:$0xff]
  %v41 = vld [vmem:[%s0 + $0xb8] sm:$0xff]
  %v42 = vld [vmem:[%s0 + $0xc0] sm:$0xff]
  %v43 = vld [vmem:[%s0 + $0xc8] sm:$0xff]
  %v44 = vld [vmem:[%s0 + $0xd0] sm:$0xff]
  %v45 = vld [vmem:[%s0 + $0xd8] sm:$0xff]
  %v46 = vld [vmem:[%s0 + $0xe0] sm:$0xff]
  %v47 = vld [vmem:[%s0 + $0xe8] sm:$0xff]
  %v48 = vld [vmem:[%s0 + $0xf0] sm:$0xff]
  %v49 = vld [vmem:[%s0 + $0xf8] sm:$0xff]
  %v50 = vld [vmem:[%s0 + $0x100] sm:$0xff]
  %v51 = vld [vmem:[%s0 + $0x108] sm:$0xff]
  %v52 = vld [vmem:[%s0 + $0x110] sm:$0xff]
  %v53 = vld [vmem:[%s0 + $0x118] sm:$0xff]
  %v54 = vld [vmem:[%s0 + $0x120] sm:$0xff]
  %v55 = vld [vmem:[%s0 + $0x128] sm:$0xff]
  %v56 = vld [vmem:[%s0 + $0x130] sm:$0xff]
  %v57 = vld [vmem:[%s0 + $0x138] sm:$0xff]
  %v58 = vld [vmem:[%s0 + $0x140] sm:$0xff]
  %v59 = vld [vmem:[%s0 + $0x148] sm:$0xff]
  %v60 = vld [vmem:[%s0 + $0x150] sm:$0xff]
  %v61 = vld [vmem:[%s0 + $0x158] sm:$0xff]
  %v62 = vld [vmem:[%s0 + $0x160] sm:$0xff]
  %v63 = vld [vmem:[%s0 + $0x168] sm:$0xff]
  %v64 = vld [vmem:[%s0 + $0x170] sm:$0xff]
  %v65 = vld [vmem:[%s0 + $0x178] sm:$0xff]
  %v66 = vld [vmem:[%s0 + $0x180] sm:$0xff]
  %v67 = vld [vmem:[%s0 + $0x188] sm:$0xff]
  %v68 = vld [vmem:[%s0 + $0x190] sm:$0xff]
  %v69 = vld [vmem:[%s0 + $0x198] sm:$0xff]
  %v70 = vld [vmem:[%s0 + $0x1a0] sm:$0xff]
  %v71 = vld [vmem:[%s0 + $0x1a8] sm:$0xff]
  %v72 = vld [vmem:[%s0 + $0x1b0] sm:$0xff]
  %v73 = vld [vmem:[%s0 + $0x1b8] sm:$0xff]
  %v74 = vld [vmem:[%s0 + $0x1c0] sm:$0xff]
  %v75 = vld [vmem:[%s0 + $0x1c8] sm:$0xff]
  %v76 = vld [vmem:[%s0 + $0x1d0] sm:$0xff]
  %v77 = vld [vmem:[%s0 + $0x1d8] sm:$0xff]
  %v78 = vld [vmem:[%s0 + $0x1e0] sm:$0xff]
  %v79 = vld [vmem:[%s0 + $0x1e8] sm:$0xff]
  %v80 = vld [vmem:[%s0 + $0x1f0] sm:$0xff]
  %v81 = vld [vmem:[%s0 + $0x1f8] sm:$0xff]
  %v82 = vld [vmem:[%s1] sm:$0xff]
  %v83 = vld [vmem:[%s1 + $0x8] sm:$0xff]
  %v84 = vld [vmem:[%s1 + $0x10] sm:$0xff]
  %v85 = vld [vmem:[%s1 + $0x18] sm:$0xff]
  %v86 = vld [vmem:[%s1 + $0x20] sm:$0xff]
  %v87 = vld [vmem:[%s1 + $0x28] sm:$0xff]
  %v88 = vld [vmem:[%s1 + $0x30] sm:$0xff]
  %v89 = vld [vmem:[%s1 + $0x38] sm:$0xff]
  %v90 = vld [vmem:[%s1 + $0x40] sm:$0xff]
  %v91 = vld [vmem:[%s1 + $0x48] sm:$0xff]
  %v92 = vld [vmem:[%s1 + $0x50] sm:$0xff]
  %v93 = vld [vmem:[%s1 + $0x58] sm:$0xff]
  %v94 = vld [vmem:[%s1 + $0x60] sm:$0xff]
  %v95 = vld [vmem:[%s1 + $0x68] sm:$0xff]
  %v96 = vld [vmem:[%s1 + $0x70] sm:$0xff]
  %v97 = vld [vmem:[%s1 + $0x78] sm:$0xff]
  %98 = vmatprep.subr.mxu0 0.0
  %99 = vmatpush1.msra.mxu0 %v82
  %100 = vmatprep.subr.mxu0 0.0
  %101 = vmatpush1.msra.mxu0 %v83
  %102 = vmatprep.subr.mxu0 0.0
  %103 = vmatpush1.msra.mxu0 %v84
  %104 = vmatprep.subr.mxu0 0.0
  %105 = vmatpush1.msra.mxu0 %v85
  %106 = vmatprep.subr.mxu0 0.0
  %107 = vmatpush1.msra.mxu0 %v86
  %108 = vmatprep.subr.mxu0 0.0
  %109 = vmatpush1.msra.mxu0 %v87
  %110 = vmatprep.subr.mxu0 0.0
  %111 = vmatpush1.msra.mxu0 %v88
  %112 = vmatprep.subr.mxu0 0.0
  %113 = vmatpush1.msra.mxu0 %v89
  %114 = vmatprep.subr.mxu0 0.0
  %115 = vmatpush1.msra.mxu0 %v90
  %116 = vmatprep.subr.mxu0 0.0
  %117 = vmatpush1.msra.mxu0 %v91
  %118 = vmatprep.subr.mxu0 0.0
  %119 = vmatpush1.msra.mxu0 %v92
  %120 = vmatprep.subr.mxu0 0.0
  %121 = vmatpush1.msra.mxu0 %v93
  %122 = vmatprep.subr.mxu0 0.0
  %123 = vmatpush1.msra.mxu0 %v94
  %124 = vmatprep.subr.mxu0 0.0
  %125 = vmatpush1.msra.mxu0 %v95
  %126 = vmatprep.subr.mxu0 0.0
  %127 = vmatpush1.msra.mxu0 %v96
  %128 = vmatprep.subr.mxu0 0.0
  %129 = vmatpush1.msra.mxu0 %v97
  %130 = vmatprep.subr.mxu0 0.0
  %131 = vmatpush1.msra.mxu0 0.0
  %132 = vmatprep.subr.mxu0 0.0
  %133 = vmatpush1.msra.mxu0 0.0
  %134 = vmatprep.subr.mxu0 0.0
  %135 = vmatpush1.msra.mxu0 0.0
  %136 = vmatprep.subr.mxu0 0.0
  %137 = vmatpush1.msra.mxu0 0.0
  %138 = vmatprep.subr.mxu0 0.0
  %139 = vmatpush1.msra.mxu0 0.0
  %140 = vmatprep.subr.mxu0 0.0
  %141 = vmatpush1.msra.mxu0 0.0
  %142 = vmatprep.subr.mxu0 0.0
  %143 = vmatpush1.msra.mxu0 0.0
  %144 = vmatprep.subr.mxu0 0.0
  %145 = vmatpush1.msra.mxu0 0.0
  %146 = vmatprep.subr.mxu0 0.0
  %147 = vmatpush1.msra.mxu0 0.0
  %148 = vmatprep.subr.mxu0 0.0
  %149 = vmatpush1.msra.mxu0 0.0
  %150 = vmatprep.subr.mxu0 0.0
  %151 = vmatpush1.msra.mxu0 0.0
  %152 = vmatprep.subr.mxu0 0.0
  %153 = vmatpush1.msra.mxu0 0.0
  %154 = vmatprep.subr.mxu0 0.0
  %155 = vmatpush1.msra.mxu0 0.0
  %156 = vmatprep.subr.mxu0 0.0
  %157 = vmatpush1.msra.mxu0 0.0
  %158 = vmatprep.subr.mxu0 0.0
  %159 = vmatpush1.msra.mxu0 0.0
  %160 = vmatprep.subr.mxu0 0.0
  %161 = vmatpush1.msra.mxu0 0.0
  %162 = vmatprep.mubr.f32.mxu0 0.0
  %163 = vmatmul.mubr.f32.gmra.mrb[0].mxu0 %v18
  %v164 = vpop.f32.mrb[0].mxu0
  %v165 = vadd.f32 0.0, %v164
  %v166 = vpop.f32.mrb[0].mxu0
  %167 = vmatprep.mubr.f32.mxu0 0.0
  %168 = vmatmul.mubr.f32.gmra.mrb[0].mxu0 %v19
  %v169 = vpop.f32.mrb[0].mxu0
  %v170 = vadd.f32 0.0, %v169
  %v171 = vpop.f32.mrb[0].mxu0
  %172 = vmatprep.mubr.f32.mxu0 0.0
  %173 = vmatmul.mubr.f32.gmra.mrb[0].mxu0 %v20
  %v174 = vpop.f32.mrb[0].mxu0
  %v175 = vadd.f32 0.0, %v174
  %v176 = vpop.f32.mrb[0].mxu0
  %177 = vmatprep.mubr.f32.mxu0 0.0
  %178 = vmatmul.mubr.f32.gmra.mrb[0].mxu0 %v21
  %v179 = vpop.f32.mrb[0].mxu0
  %v180 = vadd.f32 0.0, %v179
  %v181 = vpop.f32.mrb[0].mxu0
  %182 = vmatprep.mubr.f32.mxu0 0.0
  %183 = vmatmul.mubr.f32.gmra.mrb[0].mxu0 %v22
  %v184 = vpop.f32.mrb[0].mxu0
  %v185 = vadd.f32 0.0, %v184
  %v186 = vpop.f32.mrb[0].mxu0
  %187 = vmatprep.mubr.f32.mxu0 0.0
  %188 = vmatmul.mubr.f32.gmra.mrb[0].mxu0 %v23
  %v189 = vpop.f32.mrb[0].mxu0
  %v190 = vadd.f32 0.0, %v189
  %v191 = vpop.f32.mrb[0].mxu0
  %192 = vmatprep.mubr.f32.mxu0 0.0
  %193 = vmatmul.mubr.f32.gmra.mrb[0].mxu0 %v24
  %v194 = vpop.f32.mrb[0].mxu0
  %v195 = vadd.f32 0.0, %v194
  %v196 = vpop.f32.mrb[0].mxu0
  %197 = vmatprep.mubr.f32.mxu0 0.0
  %198 = vmatmul.mubr.f32.gmra.mrb[0].mxu0 %v25
  %v199 = vpop.f32.mrb[0].mxu0
  %v200 = vadd.f32 0.0, %v199
  %v201 = vpop.f32.mrb[0].mxu0
  %202 = vmatprep.mubr.f32.mxu0 0.0
  %203 = vmatmul.mubr.f32.gmra.mrb[0].mxu0 %v26
  %v204 = vpop.f32.mrb[0].mxu0
  %v205 = vadd.f32 0.0, %v204
  %v206 = vpop.f32.mrb[0].mxu0
  %207 = vmatprep.mubr.f32.mxu0 0.0
  %208 = vmatmul.mubr.f32.gmra.mrb[0].mxu0 %v27
  %v209 = vpop.f32.mrb[0].mxu0
  %v210 = vadd.f32 0.0, %v209
  %v211 = vpop.f32.mrb[0].mxu0
  %212 = vmatprep.mubr.f32.mxu0 0.0
  %213 = vmatmul.mubr.f32.gmra.mrb[0].mxu0 %v28
  %v214 = vpop.f32.mrb[0].mxu0
  %v215 = vadd.f32 0.0, %v214
  %v216 = vpop.f32.mrb[0].mxu0
  %217 = vmatprep.mubr.f32.mxu0 0.0
  %218 = vmatmul.mubr.f32.gmra.mrb[0].mxu0 %v29
  %v219 = vpop.f32.mrb[0].mxu0
  %v220 = vadd.f32 0.0, %v219
  %v221 = vpop.f32.mrb[0].mxu0
  %222 = vmatprep.mubr.f32.mxu0 0.0
  %223 = vmatmul.mubr.f32.gmra.mrb[0].mxu0 %v30
  %v224 = vpop.f32.mrb[0].mxu0
  %v225 = vadd.f32 0.0, %v224
  %v226 = vpop.f32.mrb[0].mxu0
  %227 = vmatprep.mubr.f32.mxu0 0.0
  %228 = vmatmul.mubr.f32.gmra.mrb[0].mxu0 %v31
  %v229 = vpop.f32.mrb[0].mxu0
  %v230 = vadd.f32 0.0, %v229
  %v231 = vpop.f32.mrb[0].mxu0
  %232 = vmatprep.mubr.f32.mxu0 0.0
  %233 = vmatmul.mubr.f32.gmra.mrb[0].mxu0 %v32
  %v234 = vpop.f32.mrb[0].mxu0
  %v235 = vadd.f32 0.0, %v234
  %v236 = vpop.f32.mrb[0].mxu0
  %237 = vmatprep.mubr.f32.mxu0 0.0
  %238 = vmatmul.mubr.f32.gmra.mrb[0].mxu0 %v33
  %v239 = vpop.f32.mrb[0].mxu0
  %v240 = vadd.f32 0.0, %v239
  %v241 = vpop.f32.mrb[0].mxu0
  %242 = vmatprep.mubr.f32.mxu0 0.0
  %243 = vmatmul.mubr.f32.gmra.mrb[0].mxu0 %v34
  %v244 = vpop.f32.mrb[0].mxu0
  %v245 = vadd.f32 0.0, %v244
  %v246 = vpop.f32.mrb[0].mxu0
  %247 = vmatprep.mubr.f32.mxu0 0.0
  %248 = vmatmul.mubr.f32.gmra.mrb[0].mxu0 %v35
  %v249 = vpop.f32.mrb[0].mxu0
  %v250 = vadd.f32 0.0, %v249
  %v251 = vpop.f32.mrb[0].mxu0
  %252 = vmatprep.mubr.f32.mxu0 0.0
  %253 = vmatmul.mubr.f32.gmra.mrb[0].mxu0 %v36
  %v254 = vpop.f32.mrb[0].mxu0
  %v255 = vadd.f32 0.0, %v254
  %v256 = vpop.f32.mrb[0].mxu0
  %257 = vmatprep.mubr.f32.mxu0 0.0
  %258 = vmatmul.mubr.f32.gmra.mrb[0].mxu0 %v37
  %v259 = vpop.f32.mrb[0].mxu0
  %v260 = vadd.f32 0.0, %v259
  %v261 = vpop.f32.mrb[0].mxu0
  %262 = vmatprep.mubr.f32.mxu0 0.0
  %263 = vmatmul.mubr.f32.gmra.mrb[0].mxu0 %v38
  %v264 = vpop.f32.mrb[0].mxu0
  %v265 = vadd.f32 0.0, %v264
  %v266 = vpop.f32.mrb[0].mxu0
  %267 = vmatprep.mubr.f32.mxu0 0.0
  %268 = vmatmul.mubr.f32.gmra.mrb[0].mxu0 %v39
  %v269 = vpop.f32.mrb[0].mxu0
  %v270 = vadd.f32 0.0, %v269
  %v271 = vpop.f32.mrb[0].mxu0
  %272 = vmatprep.mubr.f32.mxu0 0.0
  %273 = vmatmul.mubr.f32.gmra.mrb[0].mxu0 %v40
  %v274 = vpop.f32.mrb[0].mxu0
  %v275 = vadd.f32 0.0, %v274
  %v276 = vpop.f32.mrb[0].mxu0
  %277 = vmatprep.mubr.f32.mxu0 0.0
  %278 = vmatmul.mubr.f32.gmra.mrb[0].mxu0 %v41
  %v279 = vpop.f32.mrb[0].mxu0
  %v280 = vadd.f32 0.0, %v279
  %v281 = vpop.f32.mrb[0].mxu0
  %282 = vmatprep.mubr.f32.mxu0 0.0
  %283 = vmatmul.mubr.f32.gmra.mrb[0].mxu0 %v42
  %v284 = vpop.f32.mrb[0].mxu0
  %v285 = vadd.f32 0.0, %v284
  %v286 = vpop.f32.mrb[0].mxu0
  %287 = vmatprep.mubr.f32.mxu0 0.0
  %288 = vmatmul.mubr.f32.gmra.mrb[0].mxu0 %v43
  %v289 = vpop.f32.mrb[0].mxu0
  %v290 = vadd.f32 0.0, %v289
  %v291 = vpop.f32.mrb[0].mxu0
  %292 = vmatprep.mubr.f32.mxu0 0.0
  %293 = vmatmul.mubr.f32.gmra.mrb[0].mxu0 %v44
  %v294 = vpop.f32.mrb[0].mxu0
  %v295 = vadd.f32 0.0, %v294
  %v296 = vpop.f32.mrb[0].mxu0
  %297 = vmatprep.mubr.f32.mxu0 0.0
  %298 = vmatmul.mubr.f32.gmra.mrb[0].mxu0 %v45
  %v299 = vpop.f32.mrb[0].mxu0
  %v300 = vadd.f32 0.0, %v299
  %v301 = vpop.f32.mrb[0].mxu0
  %302 = vmatprep.mubr.f32.mxu0 0.0
  %303 = vmatmul.mubr.f32.gmra.mrb[0].mxu0 %v46
  %v304 = vpop.f32.mrb[0].mxu0
  %v305 = vadd.f32 0.0, %v304
  %v306 = vpop.f32.mrb[0].mxu0
  %307 = vmatprep.mubr.f32.mxu0 0.0
  %308 = vmatmul.mubr.f32.gmra.mrb[0].mxu0 %v47
  %v309 = vpop.f32.mrb[0].mxu0
  %v310 = vadd.f32 0.0, %v309
  %v311 = vpop.f32.mrb[0].mxu0
  %312 = vmatprep.mubr.f32.mxu0 0.0
  %313 = vmatmul.mubr.f32.gmra.mrb[0].mxu0 %v48
  %v314 = vpop.f32.mrb[0].mxu0
  %v315 = vadd.f32 0.0, %v314
  %v316 = vpop.f32.mrb[0].mxu0
  %317 = vmatprep.mubr.f32.mxu0 0.0
  %318 = vmatmul.mubr.f32.gmra.mrb[0].mxu0 %v49
  %v319 = vpop.f32.mrb[0].mxu0
  %v320 = vadd.f32 0.0, %v319
  %v321 = vpop.f32.mrb[0].mxu0
  %322 = vmatprep.mubr.f32.mxu0 0.0
  %323 = vmatmul.mubr.f32.gmra.mrb[0].mxu0 %v50
  %v324 = vpop.f32.mrb[0].mxu0
  %v325 = vadd.f32 0.0, %v324
  %v326 = vpop.f32.mrb[0].mxu0
  %327 = vmatprep.mubr.f32.mxu0 0.0
  %328 = vmatmul.mubr.f32.gmra.mrb[0].mxu0 %v51
  %v329 = vpop.f32.mrb[0].mxu0
  %v330 = vadd.f32 0.0, %v329
  %v331 = vpop.f32.mrb[0].mxu0
  %332 = vmatprep.mubr.f32.mxu0 0.0
  %333 = vmatmul.mubr.f32.gmra.mrb[0].mxu0 %v52
  %v334 = vpop.f32.mrb[0].mxu0
  %v335 = vadd.f32 0.0, %v334
  %v336 = vpop.f32.mrb[0].mxu0
  %337 = vmatprep.mubr.f32.mxu0 0.0
  %338 = vmatmul.mubr.f32.gmra.mrb[0].mxu0 %v53
  %v339 = vpop.f32.mrb[0].mxu0
  %v340 = vadd.f32 0.0, %v339
  %v341 = vpop.f32.mrb[0].mxu0
  %342 = vmatprep.mubr.f32.mxu0 0.0
  %343 = vmatmul.mubr.f32.gmra.mrb[0].mxu0 %v54
  %v344 = vpop.f32.mrb[0].mxu0
  %v345 = vadd.f32 0.0, %v344
  %v346 = vpop.f32.mrb[0].mxu0
  %347 = vmatprep.mubr.f32.mxu0 0.0
  %348 = vmatmul.mubr.f32.gmra.mrb[0].mxu0 %v55
  %v349 = vpop.f32.mrb[0].mxu0
  %v350 = vadd.f32 0.0, %v349
  %v351 = vpop.f32.mrb[0].mxu0
  %352 = vmatprep.mubr.f32.mxu0 0.0
  %353 = vmatmul.mubr.f32.gmra.mrb[0].mxu0 %v56
  %v354 = vpop.f32.mrb[0].mxu0
  %v355 = vadd.f32 0.0, %v354
  %v356 = vpop.f32.mrb[0].mxu0
  %357 = vmatprep.mubr.f32.mxu0 0.0
  %358 = vmatmul.mubr.f32.gmra.mrb[0].mxu0 %v57
  %v359 = vpop.f32.mrb[0].mxu0
  %v360 = vadd.f32 0.0, %v359
  %v361 = vpop.f32.mrb[0].mxu0
  %362 = vmatprep.mubr.f32.mxu0 0.0
  %363 = vmatmul.mubr.f32.gmra.mrb[0].mxu0 %v58
  %v364 = vpop.f32.mrb[0].mxu0
  %v365 = vadd.f32 0.0, %v364
  %v366 = vpop.f32.mrb[0].mxu0
  %367 = vmatprep.mubr.f32.mxu0 0.0
  %368 = vmatmul.mubr.f32.gmra.mrb[0].mxu0 %v59
  %v369 = vpop.f32.mrb[0].mxu0
  %v370 = vadd.f32 0.0, %v369
  %v371 = vpop.f32.mrb[0].mxu0
  %372 = vmatprep.mubr.f32.mxu0 0.0
  %373 = vmatmul.mubr.f32.gmra.mrb[0].mxu0 %v60
  %v374 = vpop.f32.mrb[0].mxu0
  %v375 = vadd.f32 0.0, %v374
  %v376 = vpop.f32.mrb[0].mxu0
  %377 = vmatprep.mubr.f32.mxu0 0.0
  %378 = vmatmul.mubr.f32.gmra.mrb[0].mxu0 %v61
  %v379 = vpop.f32.mrb[0].mxu0
  %v380 = vadd.f32 0.0, %v379
  %v381 = vpop.f32.mrb[0].mxu0
  %382 = vmatprep.mubr.f32.mxu0 0.0
  %383 = vmatmul.mubr.f32.gmra.mrb[0].mxu0 %v62
  %v384 = vpop.f32.mrb[0].mxu0
  %v385 = vadd.f32 0.0, %v384
  %v386 = vpop.f32.mrb[0].mxu0
  %387 = vmatprep.mubr.f32.mxu0 0.0
  %388 = vmatmul.mubr.f32.gmra.mrb[0].mxu0 %v63
  %v389 = vpop.f32.mrb[0].mxu0
  %v390 = vadd.f32 0.0, %v389
  %v391 = vpop.f32.mrb[0].mxu0
  %392 = vmatprep.mubr.f32.mxu0 0.0
  %393 = vmatmul.mubr.f32.gmra.mrb[0].mxu0 %v64
  %v394 = vpop.f32.mrb[0].mxu0
  %v395 = vadd.f32 0.0, %v394
  %v396 = vpop.f32.mrb[0].mxu0
  %397 = vmatprep.mubr.f32.mxu0 0.0
  %398 = vmatmul.mubr.f32.gmra.mrb[0].mxu0 %v65
  %v399 = vpop.f32.mrb[0].mxu0
  %v400 = vadd.f32 0.0, %v399
  %v401 = vpop.f32.mrb[0].mxu0
  %402 = vmatprep.mubr.f32.mxu0 0.0
  %403 = vmatmul.mubr.f32.gmra.mrb[0].mxu0 %v66
  %v404 = vpop.f32.mrb[0].mxu0
  %v405 = vadd.f32 0.0, %v404
  %v406 = vpop.f32.mrb[0].mxu0
  %407 = vmatprep.mubr.f32.mxu0 0.0
  %408 = vmatmul.mubr.f32.gmra.mrb[0].mxu0 %v67
  %v409 = vpop.f32.mrb[0].mxu0
  %v410 = vadd.f32 0.0, %v409
  %v411 = vpop.f32.mrb[0].mxu0
  %412 = vmatprep.mubr.f32.mxu0 0.0
  %413 = vmatmul.mubr.f32.gmra.mrb[0].mxu0 %v68
  %v414 = vpop.f32.mrb[0].mxu0
  %v415 = vadd.f32 0.0, %v414
  %v416 = vpop.f32.mrb[0].mxu0
  %417 = vmatprep.mubr.f32.mxu0 0.0
  %418 = vmatmul.mubr.f32.gmra.mrb[0].mxu0 %v69
  %v419 = vpop.f32.mrb[0].mxu0
  %v420 = vadd.f32 0.0, %v419
  %v421 = vpop.f32.mrb[0].mxu0
  %422 = vmatprep.mubr.f32.mxu0 0.0
  %423 = vmatmul.mubr.f32.gmra.mrb[0].mxu0 %v70
  %v424 = vpop.f32.mrb[0].mxu0
  %v425 = vadd.f32 0.0, %v424
  %v426 = vpop.f32.mrb[0].mxu0
  %427 = vmatprep.mubr.f32.mxu0 0.0
  %428 = vmatmul.mubr.f32.gmra.mrb[0].mxu0 %v71
  %v429 = vpop.f32.mrb[0].mxu0
  %v430 = vadd.f32 0.0, %v429
  %v431 = vpop.f32.mrb[0].mxu0
  %432 = vmatprep.mubr.f32.mxu0 0.0
  %433 = vmatmul.mubr.f32.gmra.mrb[0].mxu0 %v72
  %v434 = vpop.f32.mrb[0].mxu0
  %v435 = vadd.f32 0.0, %v434
  %v436 = vpop.f32.mrb[0].mxu0
  %437 = vmatprep.mubr.f32.mxu0 0.0
  %438 = vmatmul.mubr.f32.gmra.mrb[0].mxu0 %v73
  %v439 = vpop.f32.mrb[0].mxu0
  %v440 = vadd.f32 0.0, %v439
  %v441 = vpop.f32.mrb[0].mxu0
  %442 = vmatprep.mubr.f32.mxu0 0.0
  %443 = vmatmul.mubr.f32.gmra.mrb[0].mxu0 %v74
  %v444 = vpop.f32.mrb[0].mxu0
  %v445 = vadd.f32 0.0, %v444
  %v446 = vpop.f32.mrb[0].mxu0
  %447 = vmatprep.mubr.f32.mxu0 0.0
  %448 = vmatmul.mubr.f32.gmra.mrb[0].mxu0 %v75
  %v449 = vpop.f32.mrb[0].mxu0
  %v450 = vadd.f32 0.0, %v449
  %v451 = vpop.f32.mrb[0].mxu0
  %452 = vmatprep.mubr.f32.mxu0 0.0
  %453 = vmatmul.mubr.f32.gmra.mrb[0].mxu0 %v76
  %v454 = vpop.f32.mrb[0].mxu0
  %v455 = vadd.f32 0.0, %v454
  %v456 = vpop.f32.mrb[0].mxu0
  %457 = vmatprep.mubr.f32.mxu0 0.0
  %458 = vmatmul.mubr.f32.gmra.mrb[0].mxu0 %v77
  %v459 = vpop.f32.mrb[0].mxu0
  %v460 = vadd.f32 0.0, %v459
  %v461 = vpop.f32.mrb[0].mxu0
  %462 = vmatprep.mubr.f32.mxu0 0.0
  %463 = vmatmul.mubr.f32.gmra.mrb[0].mxu0 %v78
  %v464 = vpop.f32.mrb[0].mxu0
  %v465 = vadd.f32 0.0, %v464
  %v466 = vpop.f32.mrb[0].mxu0
  %467 = vmatprep.mubr.f32.mxu0 0.0
  %468 = vmatmul.mubr.f32.gmra.mrb[0].mxu0 %v79
  %v469 = vpop.f32.mrb[0].mxu0
  %v470 = vadd.f32 0.0, %v469
  %v471 = vpop.f32.mrb[0].mxu0
  %472 = vmatprep.mubr.f32.mxu0 0.0
  %473 = vmatmul.mubr.f32.gmra.mrb[0].mxu0 %v80
  %v474 = vpop.f32.mrb[0].mxu0
  %v475 = vadd.f32 0.0, %v474
  %v476 = vpop.f32.mrb[0].mxu0
  %477 = vmatprep.mubr.f32.mxu0 0.0
  %478 = vmatmul.mubr.f32.gmra.mrb[0].mxu0 %v81
  %v479 = vpop.f32.mrb[0].mxu0
  %v480 = vadd.f32 0.0, %v479
  %v481 = vpop.f32.mrb[0].mxu0
  %482 = vdwg.mxu0
  %483 = vst [vmem:[%s2] sm:$0xff] %v165
  %484 = vst [vmem:[%s2 + $0x8] sm:$0xff] %v170
  %485 = vst [vmem:[%s2 + $0x10] sm:$0xff] %v175
  %486 = vst [vmem:[%s2 + $0x18] sm:$0xff] %v180
  %487 = vst [vmem:[%s2 + $0x20] sm:$0xff] %v185
  %488 = vst [vmem:[%s2 + $0x28] sm:$0xff] %v190
  %489 = vst [vmem:[%s2 + $0x30] sm:$0xff] %v195
  %490 = vst [vmem:[%s2 + $0x38] sm:$0xff] %v200
  %491 = vst [vmem:[%s2 + $0x40] sm:$0xff] %v205
  %492 = vst [vmem:[%s2 + $0x48] sm:$0xff] %v210
  %493 = vst [vmem:[%s2 + $0x50] sm:$0xff] %v215
  %494 = vst [vmem:[%s2 + $0x58] sm:$0xff] %v220
  %495 = vst [vmem:[%s2 + $0x60] sm:$0xff] %v225
  %496 = vst [vmem:[%s2 + $0x68] sm:$0xff] %v230
  %497 = vst [vmem:[%s2 + $0x70] sm:$0xff] %v235
  %498 = vst [vmem:[%s2 + $0x78] sm:$0xff] %v240
  %499 = vst [vmem:[%s2 + $0x80] sm:$0xff] %v245
  %500 = vst [vmem:[%s2 + $0x88] sm:$0xff] %v250
  %501 = vst [vmem:[%s2 + $0x90] sm:$0xff] %v255
  %502 = vst [vmem:[%s2 + $0x98] sm:$0xff] %v260
  %503 = vst [vmem:[%s2 + $0xa0] sm:$0xff] %v265
  %504 = vst [vmem:[%s2 + $0xa8] sm:$0xff] %v270
  %505 = vst [vmem:[%s2 + $0xb0] sm:$0xff] %v275
  %506 = vst [vmem:[%s2 + $0xb8] sm:$0xff] %v280
  %507 = vst [vmem:[%s2 + $0xc0] sm:$0xff] %v285
  %508 = vst [vmem:[%s2 + $0xc8] sm:$0xff] %v290
  %509 = vst [vmem:[%s2 + $0xd0] sm:$0xff] %v295
  %510 = vst [vmem:[%s2 + $0xd8] sm:$0xff] %v300
  %511 = vst [vmem:[%s2 + $0xe0] sm:$0xff] %v305
  %512 = vst [vmem:[%s2 + $0xe8] sm:$0xff] %v310
  %513 = vst [vmem:[%s2 + $0xf0] sm:$0xff] %v315
  %514 = vst [vmem:[%s2 + $0xf8] sm:$0xff] %v320
  %515 = vst [vmem:[%s2 + $0x100] sm:$0xff] %v325
  %516 = vst [vmem:[%s2 + $0x108] sm:$0xff] %v330
  %517 = vst [vmem:[%s2 + $0x110] sm:$0xff] %v335
  %518 = vst [vmem:[%s2 + $0x118] sm:$0xff] %v340
  %519 = vst [vmem:[%s2 + $0x120] sm:$0xff] %v345
  %520 = vst [vmem:[%s2 + $0x128] sm:$0xff] %v350
  %521 = vst [vmem:[%s2 + $0x130] sm:$0xff] %v355
  %522 = vst [vmem:[%s2 + $0x138] sm:$0xff] %v360
  %523 = vst [vmem:[%s2 + $0x140] sm:$0xff] %v365
  %524 = vst [vmem:[%s2 + $0x148] sm:$0xff] %v370
  %525 = vst [vmem:[%s2 + $0x150] sm:$0xff] %v375
  %526 = vst [vmem:[%s2 + $0x158] sm:$0xff] %v380
  %527 = vst [vmem:[%s2 + $0x160] sm:$0xff] %v385
  %528 = vst [vmem:[%s2 + $0x168] sm:$0xff] %v390
  %529 = vst [vmem:[%s2 + $0x170] sm:$0xff] %v395
  %530 = vst [vmem:[%s2 + $0x178] sm:$0xff] %v400
  %531 = vst [vmem:[%s2 + $0x180] sm:$0xff] %v405
  %532 = vst [vmem:[%s2 + $0x188] sm:$0xff] %v410
  %533 = vst [vmem:[%s2 + $0x190] sm:$0xff] %v415
  %534 = vst [vmem:[%s2 + $0x198] sm:$0xff] %v420
  %535 = vst [vmem:[%s2 + $0x1a0] sm:$0xff] %v425
  %536 = vst [vmem:[%s2 + $0x1a8] sm:$0xff] %v430
  %537 = vst [vmem:[%s2 + $0x1b0] sm:$0xff] %v435
  %538 = vst [vmem:[%s2 + $0x1b8] sm:$0xff] %v440
  %539 = vst [vmem:[%s2 + $0x1c0] sm:$0xff] %v445
  %540 = vst [vmem:[%s2 + $0x1c8] sm:$0xff] %v450
  %541 = vst [vmem:[%s2 + $0x1d0] sm:$0xff] %v455
  %542 = vst [vmem:[%s2 + $0x1d8] sm:$0xff] %v460
  %543 = vst [vmem:[%s2 + $0x1e0] sm:$0xff] %v465
  %544 = vst [vmem:[%s2 + $0x1e8] sm:$0xff] %v470
  %545 = vst [vmem:[%s2 + $0x1f0] sm:$0xff] %v475
  %546 = vst [vmem:[%s2 + $0x1f8] sm:$0xff] %v480
  %v547 = vld [vmem:[%s3] sm:$0x1]
  %v548 = vadd.f32 %v165, %v170
  %v549 = vadd.f32 %v548, %v175
  %v550 = vadd.f32 %v549, %v180
  %v551 = vadd.f32 %v550, %v185
  %v552 = vadd.f32 %v551, %v190
  %v553 = vadd.f32 %v552, %v195
  %v554 = vadd.f32 %v553, %v200
  %v555 = vadd.f32 %v554, %v205
  %v556 = vadd.f32 %v555, %v210
  %v557 = vadd.f32 %v556, %v215
  %v558 = vadd.f32 %v557, %v220
  %v559 = vadd.f32 %v558, %v225
  %v560 = vadd.f32 %v559, %v230
  %v561 = vadd.f32 %v560, %v235
  %v562 = vadd.f32 %v561, %v240
  %v563 = vadd.f32 %v562, %v245
  %v564 = vadd.f32 %v563, %v250
  %v565 = vadd.f32 %v564, %v255
  %v566 = vadd.f32 %v565, %v260
  %v567 = vadd.f32 %v566, %v265
  %v568 = vadd.f32 %v567, %v270
  %v569 = vadd.f32 %v568, %v275
  %v570 = vadd.f32 %v569, %v280
  %v571 = vadd.f32 %v570, %v285
  %v572 = vadd.f32 %v571, %v290
  %v573 = vadd.f32 %v572, %v295
  %v574 = vadd.f32 %v573, %v300
  %v575 = vadd.f32 %v574, %v305
  %v576 = vadd.f32 %v575, %v310
  %v577 = vadd.f32 %v576, %v315
  %v578 = vadd.f32 %v577, %v320
  %v579 = vadd.f32 %v578, %v325
  %v580 = vadd.f32 %v579, %v330
  %v581 = vadd.f32 %v580, %v335
  %v582 = vadd.f32 %v581, %v340
  %v583 = vadd.f32 %v582, %v345
  %v584 = vadd.f32 %v583, %v350
  %v585 = vadd.f32 %v584, %v355
  %v586 = vadd.f32 %v585, %v360
  %v587 = vadd.f32 %v586, %v365
  %v588 = vadd.f32 %v587, %v370
  %v589 = vadd.f32 %v588, %v375
  %v590 = vadd.f32 %v589, %v380
  %v591 = vadd.f32 %v590, %v385
  %v592 = vadd.f32 %v591, %v390
  %v593 = vadd.f32 %v592, %v395
  %v594 = vadd.f32 %v593, %v400
  %v595 = vadd.f32 %v594, %v405
  %v596 = vadd.f32 %v595, %v410
  %v597 = vadd.f32 %v596, %v415
  %v598 = vadd.f32 %v597, %v420
  %v599 = vadd.f32 %v598, %v425
  %v600 = vadd.f32 %v599, %v430
  %v601 = vadd.f32 %v600, %v435
  %v602 = vadd.f32 %v601, %v440
  %v603 = vadd.f32 %v602, %v445
  %v604 = vadd.f32 %v603, %v450
  %v605 = vadd.f32 %v604, %v455
  %v606 = vadd.f32 %v605, %v460
  %v607 = vadd.f32 %v606, %v465
  %v608 = vadd.f32 %v607, %v470
  %v609 = vadd.f32 %v608, %v475
  %v610 = vadd.f32 %v609, %v480
  %v611 = vrot.slane %v610, 4
  %v612 = vadd.f32 %v610, %v611
  %v613 = vrot.slane %v612, 2
  %v614 = vadd.f32 %v612, %v613
  %v615 = vrot.slane %v614, 1
  %v616 = vadd.f32 %v614, %v615
  %v617 = vadd.f32 %v547, %v616
  %618 = vst [vmem:[%s3] sm:$0x1] %v617
  %v619 = vld [vmem:[%s3 + $0x1] sm:$0x1]
  %v620 = vmul.f32 %v165, %v165
  %v621 = vmul.f32 %v170, %v170
  %v622 = vmul.f32 %v175, %v175
  %v623 = vmul.f32 %v180, %v180
  %v624 = vmul.f32 %v185, %v185
  %v625 = vmul.f32 %v190, %v190
  %v626 = vmul.f32 %v195, %v195
  %v627 = vmul.f32 %v200, %v200
  %v628 = vmul.f32 %v205, %v205
  %v629 = vmul.f32 %v210, %v210
  %v630 = vmul.f32 %v215, %v215
  %v631 = vmul.f32 %v220, %v220
  %v632 = vmul.f32 %v225, %v225
  %v633 = vmul.f32 %v230, %v230
  %v634 = vmul.f32 %v235, %v235
  %v635 = vmul.f32 %v240, %v240
  %v636 = vmul.f32 %v245, %v245
  %v637 = vmul.f32 %v250, %v250
  %v638 = vmul.f32 %v255, %v255
  %v639 = vmul.f32 %v260, %v260
  %v640 = vmul.f32 %v265, %v265
  %v641 = vmul.f32 %v270, %v270
  %v642 = vmul.f32 %v275, %v275
  %v643 = vmul.f32 %v280, %v280
  %v644 = vmul.f32 %v285, %v285
  %v645 = vmul.f32 %v290, %v290
  %v646 = vmul.f32 %v295, %v295
  %v647 = vmul.f32 %v300, %v300
  %v648 = vmul.f32 %v305, %v305
  %v649 = vmul.f32 %v310, %v310
  %v650 = vmul.f32 %v315, %v315
  %v651 = vmul.f32 %v320, %v320
  %v652 = vmul.f32 %v325, %v325
  %v653 = vmul.f32 %v330, %v330
  %v654 = vmul.f32 %v335, %v335
  %v655 = vmul.f32 %v340, %v340
  %v656 = vmul.f32 %v345, %v345
  %v657 = vmul.f32 %v350, %v350
  %v658 = vmul.f32 %v355, %v355
  %v659 = vmul.f32 %v360, %v360
  %v660 = vmul.f32 %v365, %v365
  %v661 = vmul.f32 %v370, %v370
  %v662 = vmul.f32 %v375, %v375
  %v663 = vmul.f32 %v380, %v380
  %v664 = vmul.f32 %v385, %v385
  %v665 = vmul.f32 %v390, %v390
  %v666 = vmul.f32 %v395, %v395
  %v667 = vmul.f32 %v400, %v400
  %v668 = vmul.f32 %v405, %v405
  %v669 = vmul.f32 %v410, %v410
  %v670 = vmul.f32 %v415, %v415
  %v671 = vmul.f32 %v420, %v420
  %v672 = vmul.f32 %v425, %v425
  %v673 = vmul.f32 %v430, %v430
  %v674 = vmul.f32 %v435, %v435
  %v675 = vmul.f32 %v440, %v440
  %v676 = vmul.f32 %v445, %v445
  %v677 = vmul.f32 %v450, %v450
  %v678 = vmul.f32 %v455, %v455
  %v679 = vmul.f32 %v460, %v460
  %v680 = vmul.f32 %v465, %v465
  %v681 = vmul.f32 %v470, %v470
  %v682 = vmul.f32 %v475, %v475
  %v683 = vmul.f32 %v480, %v480
  %v684 = vadd.f32 %v620, %v621
  %v685 = vadd.f32 %v684, %v622
  %v686 = vadd.f32 %v685, %v623
  %v687 = vadd.f32 %v686, %v624
  %v688 = vadd.f32 %v687, %v625
  %v689 = vadd.f32 %v688, %v626
  %v690 = vadd.f32 %v689, %v627
  %v691 = vadd.f32 %v690, %v628
  %v692 = vadd.f32 %v691, %v629
  %v693 = vadd.f32 %v692, %v630
  %v694 = vadd.f32 %v693, %v631
  %v695 = vadd.f32 %v694, %v632
  %v696 = vadd.f32 %v695, %v633
  %v697 = vadd.f32 %v696, %v634
  %v698 = vadd.f32 %v697, %v635
  %v699 = vadd.f32 %v698, %v636
  %v700 = vadd.f32 %v699, %v637
  %v701 = vadd.f32 %v700, %v638
  %v702 = vadd.f32 %v701, %v639
  %v703 = vadd.f32 %v702, %v640
  %v704 = vadd.f32 %v703, %v641
  %v705 = vadd.f32 %v704, %v642
  %v706 = vadd.f32 %v705, %v643
  %v707 = vadd.f32 %v706, %v644
  %v708 = vadd.f32 %v707, %v645
  %v709 = vadd.f32 %v708, %v646
  %v710 = vadd.f32 %v709, %v647
  %v711 = vadd.f32 %v710, %v648
  %v712 = vadd.f32 %v711, %v649
  %v713 = vadd.f32 %v712, %v650
  %v714 = vadd.f32 %v713, %v651
  %v715 = vadd.f32 %v714, %v652
  %v716 = vadd.f32 %v715, %v653
  %v717 = vadd.f32 %v716, %v654
  %v718 = vadd.f32 %v717, %v655
  %v719 = vadd.f32 %v718, %v656
  %v720 = vadd.f32 %v719, %v657
  %v721 = vadd.f32 %v720, %v658
  %v722 = vadd.f32 %v721, %v659
  %v723 = vadd.f32 %v722, %v660
  %v724 = vadd.f32 %v723, %v661
  %v725 = vadd.f32 %v724, %v662
  %v726 = vadd.f32 %v725, %v663
  %v727 = vadd.f32 %v726, %v664
  %v728 = vadd.f32 %v727, %v665
  %v729 = vadd.f32 %v728, %v666
  %v730 = vadd.f32 %v729, %v667
  %v731 = vadd.f32 %v730, %v668
  %v732 = vadd.f32 %v731, %v669
  %v733 = vadd.f32 %v732, %v670
  %v734 = vadd.f32 %v733, %v671
  %v735 = vadd.f32 %v734, %v672
  %v736 = vadd.f32 %v735, %v673
  %v737 = vadd.f32 %v736, %v674
  %v738 = vadd.f32 %v737, %v675
  %v739 = vadd.f32 %v738, %v676
  %v740 = vadd.f32 %v739, %v677
  %v741 = vadd.f32 %v740, %v678
  %v742 = vadd.f32 %v741, %v679
  %v743 = vadd.f32 %v742, %v680
  %v744 = vadd.f32 %v743, %v681
  %v745 = vadd.f32 %v744, %v682
  %v746 = vadd.f32 %v745, %v683
  %v747 = vrot.slane %v746, 4
  %v748 = vadd.f32 %v746, %v747
  %v749 = vrot.slane %v748, 2
  %v750 = vadd.f32 %v748, %v749
  %v751 = vrot.slane %v750, 1
  %v752 = vadd.f32 %v750, %v751
  %v753 = vadd.f32 %v619, %v752
  %754 = vst [vmem:[%s3 + $0x1] sm:$0x1] %v753
  // Predicated region
  $region14: #{conv_bn_relu.2} parent=0 // pred_check
    _
  $region15: #{conv_bn_relu.2} parent=0 // pred_check_branch
    %756 = sbr.rel (0) target = $region17
  $region16: #{conv_bn_relu.2} parent=0 // pred_region
    _
  $region17: #{conv_bn_relu.2} parent=0 // pred_fallthru
    _
  // Predicated region
  $region18: #{conv_bn_relu.2} parent=0 // pred_check
    _
  $region19: #{conv_bn_relu.2} parent=0 // pred_check_branch
    %758 = sbr.rel (0) target = $region21
  $region20: #{conv_bn_relu.2} parent=0 // pred_region
    _
  $region21: #{conv_bn_relu.2} parent=0 // pred_fallthru
    _
  // Predicated region
  $region22: #{conv_bn_relu.2} parent=0 // pred_check
    _
  $region23: #{conv_bn_relu.2} parent=0 // pred_check_branch
    %760 = sbr.rel (0) target = $region25
  $region24: #{conv_bn_relu.2} parent=0 // pred_region
    _
  $region25: #{conv_bn_relu.2} parent=0 // pred_fallthru
    _
  // Predicated region
  $region26: #{conv_bn_relu.2} parent=0 // pred_check
    _
  $region27: #{conv_bn_relu.2} parent=0 // pred_check_branch
    %762 = sbr.rel (0) target = $region29
  $region28: #{conv_bn_relu.2} parent=0 // pred_region
    _
  $region29: #{conv_bn_relu.2} parent=0 // pred_fallthru
    _

</llo_original>
